<compile_context>
chip_gen: v7x
topology: tpu7x:2x2x1
jax: 0.10.0
libtpu: 0.0.40
codegen_flags: <defaults>
</compile_context>

<pallas_src>
import jax
import jax.numpy as jnp
from jax.experimental import pallas as pl
from jax.experimental.pallas import tpu as pltpu


def _scale_kernel(scale_ref, x_ref, o_ref):
    # scale_ref: (1,) f32 scalar in SMEM; x_ref / o_ref: (tile_rows, LANES) VMEM tiles.
    s = scale_ref[0]
    o_ref[...] = (x_ref[...].astype(jnp.float32) * s).astype(o_ref.dtype)


def _round_up(a: int, m: int) -> int:
    return ((a + m - 1) // m) * m


def scale_forward(x: jax.Array, scale: jax.Array, *, force_pallas: bool = False) -> jax.Array:
    """Elementwise multiply of x (any shape) by a scalar f32 parameter, via Pallas on TPU."""
    orig_shape = x.shape
    dtype = x.dtype
    total = int(x.size)
    itemsize = jnp.dtype(dtype).itemsize
    total_bytes = total * itemsize

    def _xla_mul():
        return (x.astype(jnp.float32) * scale.astype(jnp.float32)).astype(dtype)

    # Small-input fast path: pallas_call launch + pipeline prologue dwarfs the copy for
    # < ~1 MiB of data on every generation (especially v7x at 3.2 TB/s).
    if not force_pallas and total_bytes < (1 << 20):
        return _xla_mul()

    # Ragged flat sizes: a fused XLA multiply is one read + one write; a pad -> kernel ->
    # slice path would triple the HBM traffic. Just do the plain multiply.
    if total == 0 or total % 128 != 0:
        return _xla_mul()

    sub = {4: 8, 2: 16, 1: 32}.get(itemsize, 8)  # packed-sublane multiple for this dtype
    LANES = 128
    for cand in (1024, 512, 256):  # widest lane-dense slab that divides the flat size
        if total % cand == 0:
            LANES = cand
            break

    rows = total // LANES
    x2d = jnp.reshape(x, (rows, LANES))
    bytes_per_row = LANES * itemsize

    # ~2 MiB per block: near-roofline DMA length, safe (double-buffered) on all generations.
    TARGET_BLOCK_BYTES = 2 << 20

    if rows <= sub:
        tile_rows = rows  # single full-array block (block dim == array dim is always legal)
    else:
        max_tile_rows = max(sub, (TARGET_BLOCK_BYTES // bytes_per_row) // sub * sub)
        n_steps = pl.cdiv(rows, max_tile_rows)
        # Megacore shaping: >= 2 steps per TensorCore on v7x when there is enough work,
        # so each core keeps its input/output DMAs double-buffered.
        if rows >= 4 * sub:
            n_steps = max(n_steps, 4)
        elif rows >= 2 * sub:
            n_steps = max(n_steps, 2)
        if n_steps > 1 and n_steps % 2:
            n_steps += 1  # even split across the two TCs; harmless on v5e/v6e
        # Balanced, sublane-aligned tile derived from the target step count.
        tile_rows = min(rows, max(sub, _round_up(pl.cdiv(rows, n_steps), sub)))

    grid = (pl.cdiv(rows, tile_rows),)  # cdiv grid: Pallas masks the ragged boundary block

    # Explicit VMEM budget: in + out blocks, each double-buffered, plus slack.
    block_bytes = tile_rows * LANES * itemsize
    vmem_limit = min(48 << 20, 4 * block_bytes + (2 << 20))

    scale_smem = jnp.reshape(scale.astype(jnp.float32), (1,))

    out2d = pl.pallas_call(
        _scale_kernel,
        out_shape=jax.ShapeDtypeStruct(x2d.shape, dtype),
        grid=grid,
        in_specs=[
            pl.BlockSpec(memory_space=pltpu.SMEM),            # scalar scale, untiled in SMEM
            pl.BlockSpec((tile_rows, LANES), lambda i: (i, 0)),
        ],
        out_specs=pl.BlockSpec((tile_rows, LANES), lambda i: (i, 0)),
        compiler_params=pltpu.CompilerParams(
            dimension_semantics=("parallel",),
            vmem_limit_bytes=int(vmem_limit),
        ),
    )(scale_smem, x2d)

    return jnp.reshape(out2d, orig_shape)


if __name__ == "__main__":
    key = jax.random.PRNGKey(0)
    scale = jnp.asarray(1.5, dtype=jnp.float32)

    # 1) Small NCHW input, matching the PyTorch module's typical usage (wide-lane slab path).
    x = jax.random.normal(key, (2, 4, 16, 16), dtype=jnp.float32)
    y = jax.block_until_ready(scale_forward(x, scale, force_pallas=True))
    y_ref = x * scale
    assert y.shape == x.shape and y.dtype == x.dtype
    assert jnp.allclose(y, y_ref, atol=1e-6), "f32 mismatch vs reference"

    # 2) bf16 input (2 MiB of data) exercising the multi-step balanced grid (>= 4 steps).
    k2 = jax.random.PRNGKey(1)
    xb = jax.random.normal(k2, (8, 32, 64, 64), dtype=jnp.float32).astype(jnp.bfloat16)
    yb = jax.block_until_ready(scale_forward(xb, scale))
    yb_ref = (xb.astype(jnp.float32) * 1.5).astype(jnp.bfloat16)
    assert yb.dtype == jnp.bfloat16
    assert jnp.allclose(yb.astype(jnp.float32), yb_ref.astype(jnp.float32),
                        atol=1e-2, rtol=1e-2), "bf16 mismatch vs reference"

    # 3) Awkward row count (rows=35, LANES=128) exercising the masked cdiv boundary block.
    k3 = jax.random.PRNGKey(2)
    xa = jax.random.normal(k3, (5, 7, 128), dtype=jnp.float32)
    ya = jax.block_until_ready(scale_forward(xa, scale, force_pallas=True))
    assert jnp.allclose(ya, xa * scale, atol=1e-6), "masked-boundary mismatch vs reference"

    # 4) Ragged flat size (x.size % 128 != 0) takes the fused XLA fallback (no pad/slice).
    k4 = jax.random.PRNGKey(3)
    xr = jax.random.normal(k4, (3, 5, 5), dtype=jnp.float32)
    yr = jax.block_until_ready(scale_forward(xr, scale))
    assert jnp.allclose(yr, xr * scale, atol=1e-6), "ragged-fallback mismatch vs reference"

    print("KERNEL_OK")
</pallas_src>

<mosaic_0001>
module attributes {stable_mosaic.version = 11 : i64} {
  func.func @_scale_kernel(%arg0: i32, %arg1: memref<1xf32, #tpu.memory_space<smem>>, %arg2: memref<2x1024xf32, #tpu.memory_space<vmem>>, %arg3: memref<2x1024xf32, #tpu.memory_space<vmem>>) attributes {dimension_semantics = [#tpu.dimension_semantics<parallel>], iteration_bounds = array<i64: 1>, scalar_prefetch = 0 : i64, scratch_operands = 0 : i64, tpu.core_type = #tpu.core_type<tc>, window_params = [{transform_indices = @transform_0, window_bounds = array<i64: 1>}, {transform_indices = @transform_1, window_bounds = array<i64: 2, 1024>}, {transform_indices = @transform_2, window_bounds = array<i64: 2, 1024>}]} {
    %c0 = arith.constant 0 : index
    %0 = memref.load %arg1[%c0] : memref<1xf32, #tpu.memory_space<smem>>
    %c0_0 = arith.constant 0 : index
    %c0_1 = arith.constant 0 : index
    %1 = vector.load %arg2[%c0_0, %c0_1] : memref<2x1024xf32, #tpu.memory_space<vmem>>, vector<2x1024xf32>
    %2 = vector.broadcast %0 : f32 to vector<2x1024xf32>
    %3 = arith.mulf %1, %2 : vector<2x1024xf32>
    %c0_2 = arith.constant 0 : index
    %c0_3 = arith.constant 0 : index
    %4 = vector.load %arg3[%c0_2, %c0_3] : memref<2x1024xf32, #tpu.memory_space<vmem>>, vector<2x1024xf32>
    tpu.vector_store %arg3[%c0_2, %c0_3], %3 {strides = array<i32>} : memref<2x1024xf32, #tpu.memory_space<vmem>>, vector<2x1024xf32>,
    return
  }
  func.func @transform_0(%arg0: i32) -> i32 {
    %c0_i32 = arith.constant 0 : i32
    %c0_i32_0 = arith.constant 0 : i32
    return %c0_i32 : i32
  }
  func.func @transform_1(%arg0: i32) -> (i32, i32) {
    %c0_i32 = arith.constant 0 : i32
    %c0_i32_0 = arith.constant 0 : i32
    return %arg0, %c0_i32 : i32, i32
  }
  func.func @transform_2(%arg0: i32) -> (i32, i32) {
    %c0_i32 = arith.constant 0 : i32
    %c0_i32_0 = arith.constant 0 : i32
    return %arg0, %c0_i32 : i32, i32
  }
}

</mosaic_0001>

<llo_original>
// kernel: tpu_custom_call.1
$region0: #{tpu_custom_call.1}
  #allocation0 [shape = 'u32[]', space=smem, size = 0x4, offset = 0x4, fixed_abs, tag = 'smem constant byte address 0x4 - core index']
  #allocation1 [shape = 'u32[144,128]{1,0:T(1,128)}', space=vmem, size = 0x12000, scoped, tag = 'internal scratch']
  #allocation2 [shape = 'f32[1]{0:T(128)S(6)}', space=smem, size = 0x200, scoped, tag = 'scoped memory for tpu_custom_call.1']
  %s0 = inlined_call_operand.<no memory space> [shape: f32[1], index: 0, kind: input, shape index: {}]
  %s1 = inlined_call_operand.hbm [shape: f32[2,1024], index: 1, kind: input, shape index: {}]
  %s2 = inlined_call_operand.hbm [shape: f32[2,1024], index: 2, kind: output, shape index: {}]
  %s3 = sld [smem:[#allocation0]]
  $region22: #{tpu_custom_call.1} parent=0
    _
  %s5 = ssub.s32 1, %s3
  %s6 = scalar_select 0, %s5, %s3
  %7 = sst [smem:[#allocation2]] %s0
  $region1: #{tpu_custom_call.1} parent=0
    #allocation3 [shape = 'u8[8192]{0}', space=vmem, size = 0x2000, scoped, tag = 'input window, operand 1, single buffered']
    #allocation4 [shape = 's32[1]{0}', space=sflag, size = 0x4, scoped, tag = 'scoped memory for tpu_custom_call.1']
    #allocation5 [shape = 's32[1]{0}', space=sflag, size = 0x4, scoped, tag = 'scoped memory for tpu_custom_call.1']
    #allocation6 [shape = 'u8[8192]{0}', space=vmem, size = 0x2000, scoped, tag = 'output window, operand 0, single buffered']
    %8 = vsyncpa [#allocation4], 0
    %9 = vsyncpa [#allocation5], 0
    // Predicated region
    $region2: #{tpu_custom_call.1} parent=1 // pred_check
      _
    $region3: #{tpu_custom_call.1} parent=1 // pred_check_branch
      %11 = sbr.rel (0) target = $region5
    $region4: #{tpu_custom_call.1} parent=1 // pred_region
      _
    $region5: #{tpu_custom_call.1} parent=1 // pred_fallthru
      _
    // Predicated region
    $region6: #{tpu_custom_call.1} parent=1 // pred_check
      _
    $region7: #{tpu_custom_call.1} parent=1 // pred_check_branch
      %13 = sbr.rel (0) target = $region9
    $region8: #{tpu_custom_call.1} parent=1 // pred_region
      %s15 = ssub.s32 256, 256
      %16 = vsyncadd [#allocation4], %s15
      %s18 = sshll.u32 [#allocation3], 4
      %s19 = int_to_ptr.vmem [resolvable:$true] %s18
      %21 = dma.hbm_to_vmem [thread:$0]  %s1, 256, %s19, [#allocation4]
    $region9: #{tpu_custom_call.1} parent=1 // pred_fallthru
      _
    // Predicated region
    $region10: #{tpu_custom_call.1} parent=1 // pred_check
      _
    $region11: #{tpu_custom_call.1} parent=1 // pred_check_branch
      %23 = sbr.rel (0) target = $region13
    $region12: #{tpu_custom_call.1} parent=1 // pred_region
      %24 = dma.done [#allocation4], 256
    $region13: #{tpu_custom_call.1} parent=1 // pred_fallthru
      _
    %s25 = sld [smem:[#allocation2]]
    %v26 = vld [vmem:[#allocation3] sm:$0xff]
    %v27 = vld [vmem:[#allocation3 + $0x8] sm:$0xff]
    %v28 = vstv %s25
    %v29 = vmul.f32 %v26, %v28
    %v30 = vmul.f32 %v27, %v28
    %31 = vst [vmem:[#allocation6] sm:$0xff] %v29
    %32 = vst [vmem:[#allocation6 + $0x8] sm:$0xff] %v30
    // Predicated region
    $region14: #{tpu_custom_call.1} parent=1 // pred_check
      _
    $region15: #{tpu_custom_call.1} parent=1 // pred_check_branch
      %34 = sbr.rel (0) target = $region17
    $region16: #{tpu_custom_call.1} parent=1 // pred_region
      %s36 = ssub.s32 256, 256
      %37 = vsyncadd [#allocation5], %s36
      %s39 = sshll.u32 [#allocation6], 4
      %s40 = int_to_ptr.vmem [resolvable:$true] %s39
      %42 = dma.vmem_to_hbm [thread:$0]  %s40, 256, %s2, [#allocation5]
    $region17: #{tpu_custom_call.1} parent=1 // pred_fallthru
      _
    // Predicated region
    $region18: #{tpu_custom_call.1} parent=1 // pred_check
      _
    $region19: #{tpu_custom_call.1} parent=1 // pred_check_branch
      %44 = sbr.rel (0) target = $region21
    $region20: #{tpu_custom_call.1} parent=1 // pred_region
      %45 = dma.done [#allocation5], 256
    $region21: #{tpu_custom_call.1} parent=1 // pred_fallthru
      _
    %46 = vsyncpa [#allocation4], 1
    %47 = vsyncpa [#allocation5], 1

</llo_original>
